<compile_context>
chip_gen: v6e
topology: v6e:2x2x1
jax: 0.10.0
libtpu: 0.0.40
codegen_flags: <defaults>
</compile_context>

<pallas_src>
import math

import jax
import jax.numpy as jnp
from jax.experimental import pallas as pl
from jax.experimental.pallas import tpu as pltpu


def _round_up(x: int, m: int) -> int:
    return ((x + m - 1) // m) * m


def _round_down(x: int, m: int) -> int:
    return (x // m) * m


def _proj_kernel(x_ref, w_ref, b_ref, o_ref):
    # y = x @ w + b ; MXU matmul with f32 accumulation, bias add in f32 on the
    # VPU, single cast back to the output dtype.
    y = jnp.dot(x_ref[...], w_ref[...], preferred_element_type=jnp.float32)
    o_ref[...] = (y + b_ref[...].astype(jnp.float32)).astype(o_ref.dtype)


def _projection_pallas(x2d, weight_t, bias, *,
                       tile_vmem_bytes=24 << 20, max_tm=4096):
    """x2d: (M, K); weight_t: (K, N); bias: (N,) -> (M, N).  No padding."""
    M, K = x2d.shape
    N = weight_t.shape[1]
    dtype = x2d.dtype
    dtype_bytes = jnp.dtype(dtype).itemsize

    w = weight_t.astype(dtype)
    b2d = bias.reshape(1, N).astype(dtype)

    # ---- N tiling ---------------------------------------------------------
    # Lane-dense unmasked stores when N % 128 == 0; when N is ragged the block
    # last dim must equal the full array dim (one masked vst per tile, still
    # cheaper than padding + re-slicing the whole output).
    if N % 128 == 0 and N > 2048:
        TN = 2048          # keep out tile within the v7x VMEM budget
    else:
        TN = N

    # ---- TM from a VMEM byte budget ----------------------------------------
    # Double-buffered streamed x tile + out tile, plus (double-buffered)
    # weight / bias tiles.  Budget chosen to fit v7x's 64 MiB VMEM.
    elems_budget = tile_vmem_bytes // (2 * dtype_bytes)
    tm_budget = (elems_budget - (K * TN + TN)) // (K + TN)
    TM = max(8, min(_round_down(max(tm_budget, 8), 8), max_tm, _round_up(M, 8)))

    grid = (pl.cdiv(M, TM), pl.cdiv(N, TN))

    vmem_needed = 2 * (TM * K + TM * TN + K * TN + TN) * dtype_bytes
    vmem_limit = int(min(max(vmem_needed + (4 << 20), 16 << 20), 48 << 20))

    y = pl.pallas_call(
        _proj_kernel,
        out_shape=jax.ShapeDtypeStruct((M, N), dtype),
        grid_spec=pltpu.PrefetchScalarGridSpec(
            num_scalar_prefetch=0,
            grid=grid,
            in_specs=[
                pl.BlockSpec((TM, K), lambda i, j: (i, 0)),    # x rows stream
                pl.BlockSpec((K, TN), lambda i, j: (0, j)),    # weight tile
                pl.BlockSpec((1, TN), lambda i, j: (0, j)),    # bias tile
            ],
            out_specs=pl.BlockSpec((TM, TN), lambda i, j: (i, j)),
        ),
        compiler_params=pltpu.CompilerParams(
            # Both grid axes are independent -> shard across both TensorCores
            # on v7x; no-op on single-TC v5e/v6e.
            dimension_semantics=("parallel", "parallel"),
            vmem_limit_bytes=vmem_limit,
        ),
    )(x2d, w, b2d)
    return y


def unpatchify_forward(x, weight_t, bias, output_shape,
                       *, min_pallas_rows=512, tile_vmem_bytes=24 << 20):
    """x: (B, P, d_model); weight_t: (d_model, d_patch); bias: (d_patch,)."""
    B, P, d_model = x.shape
    x2d = x.reshape(B * P, d_model)

    if B * P < min_pallas_rows:
        # Tiny shapes: launch + DMA-setup overhead dominates; let XLA fuse it.
        y2d = x2d @ weight_t.astype(x2d.dtype) + bias.astype(x2d.dtype)
    else:
        y2d = _projection_pallas(x2d, weight_t, bias,
                                 tile_vmem_bytes=tile_vmem_bytes)

    # b patches d_patch -> b (patches d_patch) -> b c h w (flat reshape,
    # exactly matching the two rearranges in the torch spec).
    if len(output_shape) >= 3:
        c, h, w = output_shape[-3], output_shape[-2], output_shape[-1]
    else:
        c, h, w = 1, output_shape[-2], output_shape[-1]
    return y2d.reshape(B, c, h, w)


class UnpatchifyPallas:
    def __init__(self, *, patch_size=8, d_model=64, output_shape=(4, 16, 16),
                 key=None, min_pallas_rows=512, tile_vmem_bytes=24 << 20):
        self.output_shape = output_shape
        self.patch_size = patch_size
        self.min_pallas_rows = min_pallas_rows
        self.tile_vmem_bytes = tile_vmem_bytes
        self.num_patches = (
            math.ceil(output_shape[-2] / patch_size)
            * math.ceil(output_shape[-1] / patch_size)
        )
        total = 1
        for s in output_shape:
            total *= s
        # Matches torch's integer division; H, W must be divisible by
        # patch_size for the final reshape to be meaningful (same as the spec).
        self.d_patch = total // self.num_patches
        if self.d_patch * self.num_patches != total:
            raise ValueError("output_shape not divisible into num_patches "
                             "equal patches; final reshape would fail.")

        if key is None:
            key = jax.random.PRNGKey(0)
        kw, kb = jax.random.split(key)
        # nn.Linear init: U(-1/sqrt(in_features), 1/sqrt(in_features))
        bound = 1.0 / math.sqrt(d_model)
        # torch weight is (out, in); store transposed (in, out) for the kernel.
        w = jax.random.uniform(kw, (self.d_patch, d_model),
                               minval=-bound, maxval=bound, dtype=jnp.float32)
        self.weight_t = jnp.transpose(w)               # (d_model, d_patch)
        self.bias = jax.random.uniform(kb, (self.d_patch,),
                                       minval=-bound, maxval=bound,
                                       dtype=jnp.float32)

    def __call__(self, x):
        return unpatchify_forward(x, self.weight_t, self.bias,
                                  self.output_shape,
                                  min_pallas_rows=self.min_pallas_rows,
                                  tile_vmem_bytes=self.tile_vmem_bytes)


if __name__ == "__main__":
    # Small shapes consistent with the module:
    #   patch_size=8, d_model=32, output_shape=(4, 16, 16)
    #   -> num_patches = ceil(16/8)*ceil(16/8) = 4
    #   -> d_patch = 4*16*16 / 4 = 256 (multiple of 128 -> lane-dense stores)
    patch_size = 8
    d_model = 32
    output_shape = (4, 16, 16)
    B = 2

    key = jax.random.PRNGKey(0)
    k_mod, k_x = jax.random.split(key)

    # min_pallas_rows=1 forces the Pallas path even at this tiny size so the
    # kernel itself is exercised; production default (512) would fall back to
    # plain XLA here.
    mod = UnpatchifyPallas(patch_size=patch_size, d_model=d_model,
                           output_shape=output_shape, key=k_mod,
                           min_pallas_rows=1)

    num_patches = mod.num_patches  # 4
    x = jax.random.normal(k_x, (B, num_patches, d_model), dtype=jnp.float32)

    out = mod(x)
    jax.block_until_ready(out)

    # Reference check in plain JAX (same math as the torch module).
    ref = (x.reshape(B * num_patches, d_model) @ mod.weight_t + mod.bias)
    ref = ref.reshape(B, *output_shape)
    assert out.shape == (B, 4, 16, 16), out.shape
    assert jnp.allclose(out, ref, atol=1e-4, rtol=1e-4)

    print("KERNEL_OK")
</pallas_src>

<mosaic_0001>
module attributes {stable_mosaic.version = 11 : i64} {
  func.func @_proj_kernel(%arg0: i32, %arg1: i32, %arg2: memref<8x32xf32, #tpu.memory_space<vmem>>, %arg3: memref<32x256xf32, #tpu.memory_space<vmem>>, %arg4: memref<1x256xf32, #tpu.memory_space<vmem>>, %arg5: memref<8x256xf32, #tpu.memory_space<vmem>>) attributes {dimension_semantics = [#tpu.dimension_semantics<parallel>, #tpu.dimension_semantics<parallel>], iteration_bounds = array<i64: 1, 1>, scalar_prefetch = 0 : i64, scratch_operands = 0 : i64, tpu.core_type = #tpu.core_type<tc>, window_params = [{transform_indices = @transform_0, window_bounds = array<i64: 8, 32>}, {transform_indices = @transform_1, window_bounds = array<i64: 32, 256>}, {transform_indices = @transform_2, window_bounds = array<i64: 1, 256>}, {transform_indices = @transform_3, window_bounds = array<i64: 8, 256>}]} {
    %c0 = arith.constant 0 : index
    %c0_0 = arith.constant 0 : index
    %0 = vector.load %arg2[%c0, %c0_0] : memref<8x32xf32, #tpu.memory_space<vmem>>, vector<8x32xf32>
    %c0_1 = arith.constant 0 : index
    %c0_2 = arith.constant 0 : index
    %1 = vector.load %arg3[%c0_1, %c0_2] : memref<32x256xf32, #tpu.memory_space<vmem>>, vector<32x256xf32>
    %cst = arith.constant dense<0.000000e+00> : vector<8x256xf32>
    %2 = tpu.matmul %0, %1, %cst {dimension_numbers = #tpu.dot_dimension_numbers<[1], [0], [0], [1], [0, 0, 1, 1], [], []>} : vector<8x32xf32>, vector<32x256xf32>, vector<8x256xf32> -> vector<8x256xf32>
    %c0_3 = arith.constant 0 : index
    %c0_4 = arith.constant 0 : index
    %3 = vector.load %arg4[%c0_3, %c0_4] : memref<1x256xf32, #tpu.memory_space<vmem>>, vector<1x256xf32>
    %4 = vector.broadcast %3 : vector<1x256xf32> to vector<8x256xf32>
    %5 = arith.addf %2, %4 : vector<8x256xf32>
    %c0_5 = arith.constant 0 : index
    %c0_6 = arith.constant 0 : index
    %6 = vector.load %arg5[%c0_5, %c0_6] : memref<8x256xf32, #tpu.memory_space<vmem>>, vector<8x256xf32>
    tpu.vector_store %arg5[%c0_5, %c0_6], %5 {strides = array<i32>} : memref<8x256xf32, #tpu.memory_space<vmem>>, vector<8x256xf32>,
    return
  }
  func.func @transform_0(%arg0: i32, %arg1: i32) -> (i32, i32) {
    %c0_i32 = arith.constant 0 : i32
    %c0_i32_0 = arith.constant 0 : i32
    return %arg0, %c0_i32 : i32, i32
  }
  func.func @transform_1(%arg0: i32, %arg1: i32) -> (i32, i32) {
    %c0_i32 = arith.constant 0 : i32
    %c0_i32_0 = arith.constant 0 : i32
    return %c0_i32, %arg1 : i32, i32
  }
  func.func @transform_2(%arg0: i32, %arg1: i32) -> (i32, i32) {
    %c0_i32 = arith.constant 0 : i32
    %c0_i32_0 = arith.constant 0 : i32
    return %c0_i32, %arg1 : i32, i32
  }
  func.func @transform_3(%arg0: i32, %arg1: i32) -> (i32, i32) {
    %c0_i32 = arith.constant 0 : i32
    return %arg0, %arg1 : i32, i32
  }
}

</mosaic_0001>

<llo_original>
// kernel: tpu_custom_call.1
$region0: #{tpu_custom_call.1}
  #allocation0 [shape = 'u32[]', space=smem, size = 0x4, offset = 0x4, fixed_abs, tag = 'smem constant byte address 0x4 - core index']
  #allocation1 [shape = 'u32[144,128]{1,0:T(1,128)}', space=vmem, size = 0x12000, scoped, tag = 'internal scratch']
  %s0 = inlined_call_operand.hbm [shape: f32[8,32], index: 0, kind: input, shape index: {}]
  %s1 = inlined_call_operand.hbm [shape: f32[32,256], index: 1, kind: input, shape index: {}]
  %s2 = inlined_call_operand.vmem [shape: f32[1,256], index: 2, kind: input, shape index: {}]
  %s3 = inlined_call_operand.hbm [shape: f32[8,256], index: 3, kind: output, shape index: {}]
  %s4 = sld [smem:[#allocation0]]
  $region30: #{tpu_custom_call.1} parent=0
    _
  %s6 = ssub.s32 1, %s4
  %s7 = scalar_select 0, %s6, %s4
  $region1: #{tpu_custom_call.1} parent=0
    #allocation2 [shape = 'u8[4096]{0}', space=vmem, size = 0x1000, scoped, tag = 'input window, operand 0, single buffered']
    #allocation3 [shape = 's32[1]{0}', space=sflag, size = 0x4, scoped, tag = 'scoped memory for tpu_custom_call.1']
    #allocation4 [shape = 's32[1]{0}', space=sflag, size = 0x4, scoped, tag = 'scoped memory for tpu_custom_call.1']
    #allocation5 [shape = 'u8[32768]{0}', space=vmem, size = 0x8000, scoped, tag = 'input window, operand 1, single buffered']
    #allocation6 [shape = 's32[1]{0}', space=sflag, size = 0x4, scoped, tag = 'scoped memory for tpu_custom_call.1']
    #allocation7 [shape = 'u8[8192]{0}', space=vmem, size = 0x2000, scoped, tag = 'output window, operand 0, single buffered']
    %8 = vsyncpa [#allocation3], 0
    %9 = vsyncpa [#allocation6], 0
    %10 = vsyncpa [#allocation4], 0
    // Predicated region
    $region2: #{tpu_custom_call.1} parent=1 // pred_check
      _
    $region3: #{tpu_custom_call.1} parent=1 // pred_check_branch
      %12 = sbr.rel (0) target = $region5
    $region4: #{tpu_custom_call.1} parent=1 // pred_region
      %s14 = ssub.s32 128, 128
      %15 = vsyncadd [#allocation3], %s14
      %s17 = sshll.u32 [#allocation2], 4
      %s18 = int_to_ptr.vmem [resolvable:$true] %s17
      %20 = dma.hbm_to_vmem [thread:$0]  %s0, 128, %s18, [#allocation3]
    $region5: #{tpu_custom_call.1} parent=1 // pred_fallthru
      _
    // Predicated region
    $region6: #{tpu_custom_call.1} parent=1 // pred_check
      _
    $region7: #{tpu_custom_call.1} parent=1 // pred_check_branch
      %22 = sbr.rel (0) target = $region9
    $region8: #{tpu_custom_call.1} parent=1 // pred_region
      %s24 = ssub.s32 1024, 1024
      %25 = vsyncadd [#allocation6], %s24
      %s26 = sshll.u32 [#allocation5], 4
      %s27 = int_to_ptr.vmem [resolvable:$true] %s26
      %32 = dma.hbm_to_vmem [thread:$0]  %s1, 1024, %s27, [#allocation6], 256, 256, 16
    $region9: #{tpu_custom_call.1} parent=1 // pred_fallthru
      _
    // Predicated region
    $region10: #{tpu_custom_call.1} parent=1 // pred_check
      _
    $region11: #{tpu_custom_call.1} parent=1 // pred_check_branch
      %34 = sbr.rel (0) target = $region13
    $region12: #{tpu_custom_call.1} parent=1 // pred_region
      _
    $region13: #{tpu_custom_call.1} parent=1 // pred_fallthru
      _
    // Predicated region
    $region14: #{tpu_custom_call.1} parent=1 // pred_check
      _
    $region15: #{tpu_custom_call.1} parent=1 // pred_check_branch
      %36 = sbr.rel (0) target = $region17
    $region16: #{tpu_custom_call.1} parent=1 // pred_region
      %37 = dma.done [#allocation3], 128
    $region17: #{tpu_custom_call.1} parent=1 // pred_fallthru
      _
    // Predicated region
    $region18: #{tpu_custom_call.1} parent=1 // pred_check
      _
    $region19: #{tpu_custom_call.1} parent=1 // pred_check_branch
      %39 = sbr.rel (0) target = $region21
    $region20: #{tpu_custom_call.1} parent=1 // pred_region
      %40 = dma.done [#allocation6], 1024
    $region21: #{tpu_custom_call.1} parent=1 // pred_fallthru
      _
    %v41 = vld [vmem:[#allocation2] sm:$0xff]
    %v42 = vld [vmem:[#allocation5] sm:$0xff]
    %v43 = vld [vmem:[#allocation5 + $0x8] sm:$0xff]
    %v44 = vld [vmem:[#allocation5 + $0x10] sm:$0xff]
    %v45 = vld [vmem:[#allocation5 + $0x18] sm:$0xff]
    %v46 = vld [vmem:[#allocation5 + $0x20] sm:$0xff]
    %v47 = vld [vmem:[#allocation5 + $0x28] sm:$0xff]
    %v48 = vld [vmem:[#allocation5 + $0x30] sm:$0xff]
    %v49 = vld [vmem:[#allocation5 + $0x38] sm:$0xff]
    %v50 = vld [vmem:[%s2] sm:$0x3]
    %v52 = vlaneseq
    %v53 = vshrl.u32 %v52, 7
    %v54 = vsub.s32 0, %v53
    %v55 = vrot.slane %v50, %v54
    %v56 = vlaneseq
    %v57 = vshrl.u32 %v56, 7
    %v58 = vsub.s32 1, %v57
    %v59 = vrot.slane %v50, %v58
    %vm62 = vcmask 261120
    %v64 = vsel %vm62, %v41, 0
    %66 = vmatprep.subr.mxu0 0.0
    %67 = vmatpush1.msra.mxu0 0.0
    %68 = vmatprep.subr.mxu0 0.0
    %69 = vmatpush1.msra.mxu0 0.0
    %70 = vmatprep.subr.mxu0 0.0
    %71 = vmatpush1.msra.mxu0 0.0
    %72 = vmatprep.subr.mxu0 0.0
    %73 = vmatpush1.msra.mxu0 0.0
    %74 = vmatprep.subr.mxu0 0.0
    %75 = vmatpush1.msra.mxu0 0.0
    %76 = vmatprep.subr.mxu0 0.0
    %77 = vmatpush1.msra.mxu0 0.0
    %78 = vmatprep.subr.mxu0 0.0
    %79 = vmatpush1.msra.mxu0 0.0
    %80 = vmatprep.subr.mxu0 0.0
    %81 = vmatpush1.msra.mxu0 0.0
    %82 = vmatprep.subr.mxu0 0.0
    %83 = vmatpush1.msra.mxu0 0.0
    %84 = vmatprep.subr.mxu0 0.0
    %85 = vmatpush1.msra.mxu0 0.0
    %86 = vmatprep.subr.mxu0 0.0
    %87 = vmatpush1.msra.mxu0 0.0
    %88 = vmatprep.subr.mxu0 0.0
    %89 = vmatpush1.msra.mxu0 0.0
    %90 = vmatprep.subr.mxu0 %v49
    %91 = vmatpush1.msra.mxu0 %v48
    %92 = vmatprep.subr.mxu0 %v47
    %93 = vmatpush1.msra.mxu0 %v46
    %94 = vmatprep.subr.mxu0 %v45
    %95 = vmatpush1.msra.mxu0 %v44
    %96 = vmatprep.subr.mxu0 %v43
    %97 = vmatpush1.msra.mxu0 %v42
    %98 = vmatprep.subr.mxu0 0.0
    %99 = vmatpush2.msra.mxu0 0.0
    %100 = vmatprep.subr.mxu0 0.0
    %101 = vmatpush2.msra.mxu0 0.0
    %102 = vmatprep.subr.mxu0 0.0
    %103 = vmatpush2.msra.mxu0 0.0
    %104 = vmatprep.subr.mxu0 0.0
    %105 = vmatpush2.msra.mxu0 0.0
    %106 = vmatprep.subr.mxu0 0.0
    %107 = vmatpush2.msra.mxu0 0.0
    %108 = vmatprep.subr.mxu0 0.0
    %109 = vmatpush2.msra.mxu0 0.0
    %110 = vmatprep.subr.mxu0 0.0
    %111 = vmatpush2.msra.mxu0 0.0
    %112 = vmatprep.subr.mxu0 0.0
    %113 = vmatpush2.msra.mxu0 0.0
    %114 = vmatprep.subr.mxu0 0.0
    %115 = vmatpush2.msra.mxu0 0.0
    %116 = vmatprep.subr.mxu0 0.0
    %117 = vmatpush2.msra.mxu0 0.0
    %118 = vmatprep.subr.mxu0 0.0
    %119 = vmatpush2.msra.mxu0 0.0
    %120 = vmatprep.subr.mxu0 0.0
    %121 = vmatpush2.msra.mxu0 0.0
    %122 = vmatprep.subr.mxu0 0.0
    %123 = vmatpush2.msra.mxu0 0.0
    %124 = vmatprep.subr.mxu0 0.0
    %125 = vmatpush2.msra.mxu0 0.0
    %126 = vmatprep.subr.mxu0 0.0
    %127 = vmatpush2.msra.mxu0 0.0
    %128 = vmatprep.subr.mxu0 0.0
    %129 = vmatpush2.msra.mxu0 0.0
    %130 = vmatprep.mubr.f32.mxu0 0.0
    %131 = vmatmul.mubr.f32.gmra.mxu0 %v64
    %v132 = vpop.f32.mrf.mxu0
    %v133 = vadd.f32 %v55, %v132
    %v134 = vpop.f32.mrf.mxu0
    %v135 = vadd.f32 %v59, %v134
    %136 = vdwg.mxu0
    %137 = vst [vmem:[#allocation7] sm:$0xff] %v133
    %138 = vst [vmem:[#allocation7 + $0x8] sm:$0xff] %v135
    // Predicated region
    $region22: #{tpu_custom_call.1} parent=1 // pred_check
      _
    $region23: #{tpu_custom_call.1} parent=1 // pred_check_branch
      %140 = sbr.rel (0) target = $region25
    $region24: #{tpu_custom_call.1} parent=1 // pred_region
      %s142 = ssub.s32 256, 256
      %143 = vsyncadd [#allocation4], %s142
      %s145 = sshll.u32 [#allocation7], 4
      %s146 = int_to_ptr.vmem [resolvable:$true] %s145
      %148 = dma.vmem_to_hbm [thread:$0]  %s146, 256, %s3, [#allocation4]
    $region25: #{tpu_custom_call.1} parent=1 // pred_fallthru
      _
    // Predicated region
    $region26: #{tpu_custom_call.1} parent=1 // pred_check
      _
    $region27: #{tpu_custom_call.1} parent=1 // pred_check_branch
      %150 = sbr.rel (0) target = $region29
    $region28: #{tpu_custom_call.1} parent=1 // pred_region
      %151 = dma.done [#allocation4], 256
    $region29: #{tpu_custom_call.1} parent=1 // pred_fallthru
      _
    %152 = vsyncpa [#allocation3], 1
    %153 = vsyncpa [#allocation6], 1
    %154 = vsyncpa [#allocation4], 1

</llo_original>
